<compile_context>
chip_gen: v7x
topology: tpu7x:2x2x1
jax: 0.10.0
libtpu: 0.0.40
codegen_flags: <defaults>
</compile_context>

<pallas_src>
import functools

import jax
import jax.numpy as jnp
from jax.experimental import pallas as pl
from jax.experimental.pallas import tpu as pltpu

_LANE = 128


def _vmem_capacity_bytes():
    """Physical per-core VMEM (128 MiB v5e/v6e, 64 MiB v7x); conservative fallback."""
    try:
        info = pltpu.get_tpu_info()
        for attr in ("vmem_capacity_bytes", "vmem_size_bytes", "vmem_bytes"):
            v = getattr(info, attr, None)
            if isinstance(v, (int, float)) and v > 0:
                return int(v)
    except Exception:
        pass
    return 64 << 20  # most constrained generation (v7x per TensorCore)


def _pick_hw_tile(hw, c, itemsize, budget_bytes):
    """Largest lane-dense HW tile whose per-step footprint fits the byte budget.

    Per grid step the auto-pipeline holds ~2x (double-buffer) x (input + output)
    tiles plus ~2 f32-sized intermediates from the elementwise chain:
        C * T * (4 * itemsize + 2 * 4) bytes.
    Sized in bytes (multi-MiB buffers) instead of a fixed lane cap so small/medium-C
    inputs still get long, roofline-efficient DMAs; uses the real itemsize so bf16
    tiles are not needlessly halved.
    """
    per_lane = c * (4 * int(itemsize) + 2 * 4)
    cap = max(_LANE, (budget_bytes // per_lane) // _LANE * _LANE)
    if hw <= cap:
        return hw  # whole spatial extent in one block (full-dim block: always legal)
    # Prefer a tile that divides HW exactly (no ragged-tile masking), but never
    # shrink below half the byte-sized cap just to find a divisor.
    if hw % _LANE == 0:
        t = cap
        while t >= max(_LANE, cap // 2):
            if hw % t == 0:
                return t
            t -= _LANE
    return cap


def _apply(x, cw, w, bias):
    """Apply channel weights + 1x1-conv spatial attention to one (C, T) tile.

    x: (C, T) native dtype; cw, w: (C, 1) float32; bias: float32 scalar.
    Elementwise math stays in the input dtype (native bf16 VPU on v6e/v7x);
    the channel reduction / logits accumulate in f32 via dtype promotion.
    """
    c = x.shape[0]
    xm = x * cw.astype(x.dtype)                         # x * channel_weights
    if c >= 128:
        # Large C: push the channel contraction onto the MXU instead of the XLU.
        logits = jnp.dot(w.astype(x.dtype).T, xm,
                         preferred_element_type=jnp.float32) + bias   # (1, T)
    else:
        # Small C: per-channel weighted sum on XLU/VPU (free filler when mem-bound).
        logits = jnp.sum(xm * w, axis=0, keepdims=True) + bias        # f32 accum
    sw = jax.nn.sigmoid(logits)                         # (1, T) spatial attention (EUP)
    return (xm * sw.astype(x.dtype)).astype(x.dtype)    # x * spatial_weights


def _fused_kernel(w_ref, b_ref, x_ref, o_ref, *, inv_hw):
    # Single pass over one batch element's VMEM-resident (C, HW) slab.
    # w_ref: (C, 1) f32 conv weight; b_ref: (1,) f32 SMEM bias;
    # x_ref/o_ref: (1, C, HW).
    x = x_ref[0]                                                        # (C, HW)
    mean = jnp.sum(x, axis=1, keepdims=True, dtype=jnp.float32) * inv_hw  # AdaptiveAvgPool2d(1)
    # NOTE: matches the torch module exactly; the denominator can be ~0 or negative
    # for zero-mean inputs (numerically fragile, but faithful).
    denom = jnp.sum(mean, axis=0, keepdims=True) + 1e-6
    cw = mean / denom                                                   # (C, 1)
    o_ref[0] = _apply(x, cw, w_ref[...], b_ref[0])


def _channel_weights_kernel(x_ref, cw_ref, *, inv_hw, hw, tile, need_mask):
    # Phase 1: x_ref (1, C, T) tile; cw_ref (1, C, 1) resident accumulator ->
    # normalized channel weights on the last HW tile.
    t = pl.program_id(1)
    nt = pl.num_programs(1)

    @pl.when(t == 0)
    def _():
        cw_ref[...] = jnp.zeros_like(cw_ref)

    x = x_ref[0]                                                        # (C, T)

    if need_mask:  # static: only emitted when T does not divide HW
        # Unmasked fast path on all full tiles; mask only the ragged last tile.
        @pl.when(t < nt - 1)
        def _():
            cw_ref[0] += jnp.sum(x, axis=1, keepdims=True, dtype=jnp.float32)

        @pl.when(t == nt - 1)
        def _():
            idx = jax.lax.broadcasted_iota(jnp.int32, x.shape, 1) + t * tile
            xm = jnp.where(idx < hw, x, jnp.zeros_like(x))
            cw_ref[0] += jnp.sum(xm, axis=1, keepdims=True, dtype=jnp.float32)
    else:
        cw_ref[0] += jnp.sum(x, axis=1, keepdims=True, dtype=jnp.float32)

    @pl.when(t == nt - 1)
    def _():
        mean = cw_ref[0] * inv_hw                       # AdaptiveAvgPool2d(1)
        denom = jnp.sum(mean, axis=0, keepdims=True) + 1e-6  # faithful to torch
        cw_ref[0] = mean / denom


def _apply_kernel(cw_ref, w_ref, b_ref, x_ref, o_ref):
    # Phase 2: cw_ref (1, C, 1) channel weights; w_ref (C, 1); b_ref (1,) SMEM;
    # x_ref/o_ref (1, C, T). OOB lanes of a ragged last tile never mix across
    # lanes, so their garbage outputs are simply discarded by the pipeline.
    o_ref[0] = _apply(x_ref[0], cw_ref[0], w_ref[...], b_ref[0])


def static_attention(x_nchw, conv_weight, conv_bias, *, hw_tile=None, force_tiled=False):
    """x_nchw: (B, C, H, W); conv_weight: (1, C, 1, 1); conv_bias: (1,)."""
    B, C, H, W = x_nchw.shape
    HW = H * W
    x = x_nchw.reshape(B, C, HW)                        # lanes <- H*W (free reshape)
    w = conv_weight.reshape(C, 1).astype(jnp.float32)
    b = conv_bias.reshape(1).astype(jnp.float32)
    itemsize = int(x.dtype.itemsize)
    inv_hw = 1.0 / HW

    # Per-generation VMEM budgeting.
    vmem_cap = _vmem_capacity_bytes()                   # 128 MiB v5e/v6e, 64 MiB v7x
    vmem_limit = int(min(vmem_cap * 3 // 4, 96 << 20))  # raised scoped limit, with headroom
    slab_budget = vmem_limit // 2                       # ~48 MiB v5e/v6e, ~24 MiB v7x
    tile_budget = min(24 << 20, slab_budget)            # keep tiled-path buffers multi-MiB

    # Fused single-pass path: 2x HBM traffic instead of 3x when the per-batch slab
    # (double-buffered in+out plus f32 intermediates) fits the budget.
    fused_bytes = 4 * C * HW * itemsize + 3 * C * HW * 4
    if (not force_tiled) and hw_tile is None and fused_bytes <= slab_budget:
        out = pl.pallas_call(
            functools.partial(_fused_kernel, inv_hw=inv_hw),
            out_shape=jax.ShapeDtypeStruct((B, C, HW), x.dtype),
            grid_spec=pltpu.PrefetchScalarGridSpec(
                num_scalar_prefetch=0,
                grid=(B,),
                in_specs=[
                    pl.BlockSpec((C, 1), lambda bi: (0, 0)),             # conv weight
                    pl.BlockSpec(memory_space=pltpu.MemorySpace.SMEM),   # conv bias
                    pl.BlockSpec((1, C, HW), lambda bi: (bi, 0, 0)),     # x slab
                ],
                out_specs=pl.BlockSpec((1, C, HW), lambda bi: (bi, 0, 0)),
            ),
            compiler_params=pltpu.CompilerParams(
                dimension_semantics=("parallel",),
                vmem_limit_bytes=vmem_limit),
        )(w, b, x)
        return out.reshape(B, C, H, W)

    # Two-phase tiled fallback for large C * HW.
    T = int(hw_tile) if hw_tile is not None else _pick_hw_tile(HW, C, itemsize, tile_budget)
    num_t = pl.cdiv(HW, T)
    need_mask = (num_t * T != HW)

    # Phase 1: normalized per-channel weights, (B, C, 1) in f32.
    cw = pl.pallas_call(
        functools.partial(_channel_weights_kernel,
                          inv_hw=inv_hw, hw=HW, tile=T, need_mask=need_mask),
        out_shape=jax.ShapeDtypeStruct((B, C, 1), jnp.float32),
        grid_spec=pltpu.PrefetchScalarGridSpec(
            num_scalar_prefetch=0,
            grid=(B, num_t),
            in_specs=[pl.BlockSpec((1, C, T), lambda bi, ti: (bi, 0, ti))],
            out_specs=pl.BlockSpec((1, C, 1), lambda bi, ti: (bi, 0, 0)),
        ),
        compiler_params=pltpu.CompilerParams(
            dimension_semantics=("parallel", "arbitrary"),
            vmem_limit_bytes=vmem_limit),
    )(x)

    # Phase 2: apply channel weights + 1x1-conv spatial attention, tile by tile.
    out = pl.pallas_call(
        _apply_kernel,
        out_shape=jax.ShapeDtypeStruct((B, C, HW), x.dtype),
        grid_spec=pltpu.PrefetchScalarGridSpec(
            num_scalar_prefetch=0,
            grid=(B, num_t),
            in_specs=[
                pl.BlockSpec((1, C, 1), lambda bi, ti: (bi, 0, 0)),      # channel weights
                pl.BlockSpec((C, 1), lambda bi, ti: (0, 0)),             # conv weight
                pl.BlockSpec(memory_space=pltpu.MemorySpace.SMEM),       # conv bias
                pl.BlockSpec((1, C, T), lambda bi, ti: (bi, 0, ti)),     # x tile
            ],
            out_specs=pl.BlockSpec((1, C, T), lambda bi, ti: (bi, 0, ti)),
        ),
        compiler_params=pltpu.CompilerParams(
            dimension_semantics=("parallel", "parallel"),
            vmem_limit_bytes=vmem_limit),
    )(cw, w, b, x)

    return out.reshape(B, C, H, W)


def _reference(x, conv_weight, conv_bias):
    # Pure-JAX reference mirroring the PyTorch forward.
    cw = jnp.mean(x, axis=(2, 3), keepdims=True)
    cw = cw / (jnp.sum(cw, axis=1, keepdims=True) + 1e-6)
    xm = x * cw
    w = conv_weight.reshape(1, -1, 1, 1)
    logits = jnp.sum(xm * w, axis=1, keepdims=True) + conv_bias.reshape(1, 1, 1, 1)
    return xm * jax.nn.sigmoid(logits)


if __name__ == "__main__":
    key = jax.random.PRNGKey(0)
    kx, kw, kb, kx2 = jax.random.split(key, 4)

    B, C, H, W = 2, 4, 16, 16
    x = jax.random.normal(kx, (B, C, H, W), dtype=jnp.float32)
    conv_weight = jax.random.normal(kw, (1, C, 1, 1), dtype=jnp.float32) * 0.1
    conv_bias = jax.random.normal(kb, (1,), dtype=jnp.float32) * 0.1

    ref = _reference(x, conv_weight, conv_bias)

    # Fused single-pass path (per-batch slab resident in VMEM; 2x HBM traffic).
    out = jax.block_until_ready(static_attention(x, conv_weight, conv_bias))
    assert out.shape == (B, C, H, W)
    assert jnp.allclose(out, ref, atol=1e-5, rtol=1e-5), "mismatch vs reference (fused)"

    # Two-phase tiled fallback with the default byte-sized tile.
    out_f = jax.block_until_ready(
        static_attention(x, conv_weight, conv_bias, force_tiled=True))
    assert jnp.allclose(out_f, ref, atol=1e-5, rtol=1e-5), "mismatch vs reference (tiled, auto)"

    # Multi-tile path: HW=256 split into two 128-lane tiles (exercises the
    # resident-accumulator reduction across the 'arbitrary' HW grid axis).
    out_t = jax.block_until_ready(
        static_attention(x, conv_weight, conv_bias, hw_tile=128))
    assert jnp.allclose(out_t, ref, atol=1e-5, rtol=1e-5), "mismatch vs reference (tiled, 128)"

    # Ragged path: HW=192 with 128-lane tiles -> partial last tile (masking now only
    # runs on the last tile; out-of-bounds output lanes are discarded by the pipeline).
    x2 = jax.random.normal(kx2, (B, C, 16, 12), dtype=jnp.float32)
    out_r = jax.block_until_ready(static_attention(x2, conv_weight, conv_bias, hw_tile=128))
    ref_r = _reference(x2, conv_weight, conv_bias)
    assert jnp.allclose(out_r, ref_r, atol=1e-5, rtol=1e-5), "mismatch vs reference (ragged)"

    print("KERNEL_OK")
</pallas_src>

<mosaic_0001>
module attributes {stable_mosaic.version = 11 : i64} {
  func.func @_fused_kernel(%arg0: i32, %arg1: memref<4x1xf32, #tpu.memory_space<vmem>>, %arg2: memref<1xf32, #tpu.memory_space<smem>>, %arg3: memref<1x4x256xf32, #tpu.memory_space<vmem>>, %arg4: memref<1x4x256xf32, #tpu.memory_space<vmem>>) attributes {dimension_semantics = [#tpu.dimension_semantics<parallel>], iteration_bounds = array<i64: 2>, scalar_prefetch = 0 : i64, scratch_operands = 0 : i64, tpu.core_type = #tpu.core_type<tc>, window_params = [{pipeline_mode = #tpu.pipeline_mode<synchronous>, transform_indices = @transform_0, window_bounds = array<i64: 4, 1>}, {transform_indices = @transform_1, window_bounds = array<i64: 1>}, {transform_indices = @transform_2, window_bounds = array<i64: 1, 4, 256>}, {transform_indices = @transform_3, window_bounds = array<i64: 1, 4, 256>}]} {
    %c0 = arith.constant 0 : index
    %c0_0 = arith.constant 0 : index
    %c0_1 = arith.constant 0 : index
    %0 = vector.load %arg3[%c0, %c0_0, %c0_1] : memref<1x4x256xf32, #tpu.memory_space<vmem>>, vector<1x4x256xf32>
    %1 = vector.shape_cast %0 : vector<1x4x256xf32> to vector<4x256xf32>
    %cst = arith.constant dense<0.000000e+00> : vector<4xf32>
    %2 = vector.multi_reduction <add>, %1, %cst [1] : vector<4x256xf32> to vector<4xf32>
    %3 = vector.shape_cast %2 : vector<4xf32> to vector<4x1xf32>
    %cst_2 = arith.constant 3.906250e-03 : f32
    %4 = vector.broadcast %cst_2 : f32 to vector<4x1xf32>
    %5 = arith.mulf %3, %4 : vector<4x1xf32>
    %cst_3 = arith.constant dense<0.000000e+00> : vector<1xf32>
    %6 = vector.multi_reduction <add>, %5, %cst_3 [0] : vector<4x1xf32> to vector<1xf32>
    %7 = vector.shape_cast %6 : vector<1xf32> to vector<1x1xf32>
    %cst_4 = arith.constant 9.99999997E-7 : f32
    %8 = vector.broadcast %cst_4 : f32 to vector<1x1xf32>
    %9 = arith.addf %7, %8 : vector<1x1xf32>
    %10 = vector.broadcast %9 : vector<1x1xf32> to vector<4x1xf32>
    %11 = arith.divf %5, %10 : vector<4x1xf32>
    %c0_5 = arith.constant 0 : index
    %c0_6 = arith.constant 0 : index
    %12 = vector.load %arg1[%c0_5, %c0_6] : memref<4x1xf32, #tpu.memory_space<vmem>>, vector<4x1xf32>
    %c0_7 = arith.constant 0 : index
    %13 = memref.load %arg2[%c0_7] : memref<1xf32, #tpu.memory_space<smem>>
    %14 = vector.broadcast %11 : vector<4x1xf32> to vector<4x256xf32>
    %15 = arith.mulf %1, %14 : vector<4x256xf32>
    %16 = vector.broadcast %12 : vector<4x1xf32> to vector<4x256xf32>
    %17 = arith.mulf %15, %16 : vector<4x256xf32>
    %cst_8 = arith.constant dense<0.000000e+00> : vector<256xf32>
    %18 = vector.multi_reduction <add>, %17, %cst_8 [0] : vector<4x256xf32> to vector<256xf32>
    %19 = vector.shape_cast %18 : vector<256xf32> to vector<1x256xf32>
    %20 = vector.broadcast %13 : f32 to vector<1x256xf32>
    %21 = arith.addf %19, %20 : vector<1x256xf32>
    %22 = arith.negf %21 : vector<1x256xf32>
    %23 = math.exp %22 : vector<1x256xf32>
    %cst_9 = arith.constant 1.000000e+00 : f32
    %24 = vector.broadcast %cst_9 : f32 to vector<1x256xf32>
    %25 = arith.addf %24, %23 : vector<1x256xf32>
    %26 = arith.divf %24, %25 : vector<1x256xf32>
    %27 = vector.broadcast %26 : vector<1x256xf32> to vector<4x256xf32>
    %28 = arith.mulf %15, %27 : vector<4x256xf32>
    %c0_10 = arith.constant 0 : index
    %c0_11 = arith.constant 0 : index
    %c0_12 = arith.constant 0 : index
    %29 = vector.load %arg4[%c0_10, %c0_11, %c0_12] : memref<1x4x256xf32, #tpu.memory_space<vmem>>, vector<1x4x256xf32>
    %30 = vector.shape_cast %29 : vector<1x4x256xf32> to vector<4x256xf32>
    %31 = vector.shape_cast %28 : vector<4x256xf32> to vector<1x4x256xf32>
    tpu.vector_store %arg4[%c0_10, %c0_11, %c0_12], %31 {strides = array<i32>} : memref<1x4x256xf32, #tpu.memory_space<vmem>>, vector<1x4x256xf32>,
    return
  }
  func.func @transform_0(%arg0: i32) -> (i32, i32) {
    %c0_i32 = arith.constant 0 : i32
    %c0_i32_0 = arith.constant 0 : i32
    %c0_i32_1 = arith.constant 0 : i32
    return %c0_i32, %c0_i32_0 : i32, i32
  }
  func.func @transform_1(%arg0: i32) -> i32 {
    %c0_i32 = arith.constant 0 : i32
    %c0_i32_0 = arith.constant 0 : i32
    return %c0_i32 : i32
  }
  func.func @transform_2(%arg0: i32) -> (i32, i32, i32) {
    %c0_i32 = arith.constant 0 : i32
    %c0_i32_0 = arith.constant 0 : i32
    %c0_i32_1 = arith.constant 0 : i32
    return %arg0, %c0_i32, %c0_i32_0 : i32, i32, i32
  }
  func.func @transform_3(%arg0: i32) -> (i32, i32, i32) {
    %c0_i32 = arith.constant 0 : i32
    %c0_i32_0 = arith.constant 0 : i32
    %c0_i32_1 = arith.constant 0 : i32
    return %arg0, %c0_i32, %c0_i32_0 : i32, i32, i32
  }
}

</mosaic_0001>

<llo_original>
// kernel: tpu_custom_call.1
$region0: #{tpu_custom_call.1}
  #allocation0 [shape = 'u32[]', space=smem, size = 0x4, offset = 0x4, fixed_abs, tag = 'smem constant byte address 0x4 - core index']
  #allocation1 [shape = 'u32[144,128]{1,0:T(1,128)}', space=vmem, size = 0x12000, scoped, tag = 'internal scratch']
  #allocation2 [shape = 'f32[1]{0:T(128)S(6)}', space=smem, size = 0x200, scoped, tag = 'scoped memory for tpu_custom_call.1']
  %s0 = inlined_call_operand.vmem [shape: f32[4,1], index: 0, kind: input, shape index: {}]
  %s1 = inlined_call_operand.<no memory space> [shape: f32[1], index: 1, kind: input, shape index: {}]
  %s2 = inlined_call_operand.hbm [shape: f32[2,4,256], index: 2, kind: input, shape index: {}]
  %s3 = inlined_call_operand.hbm [shape: f32[2,4,256], index: 3, kind: output, shape index: {}]
  %s4 = sld [smem:[#allocation0]]
  $region49: #{tpu_custom_call.1} parent=0
    _
  %s6 = ssub.s32 1, %s4
  %s7 = scalar_select 0, %s6, %s4
  %8 = sst [smem:[#allocation2]] %s1
  $region1: #{tpu_custom_call.1} parent=0
    #allocation3 [shape = 'u8[8192]{0}', space=vmem, size = 0x2000, scoped, tag = 'input window, operand 2']
    #allocation4 [shape = 's32[2]{0}', space=sflag, size = 0x8, scoped, tag = 'scoped memory for tpu_custom_call.1']
    #allocation5 [shape = 's32[2]{0}', space=sflag, size = 0x8, scoped, tag = 'scoped memory for tpu_custom_call.1']
    #allocation6 [shape = 'u8[8192]{0}', space=vmem, size = 0x2000, scoped, tag = 'output window, operand 0']
    %9 = vsyncpa [#allocation4], 0
    %s10 = scalar_lea.sflag [#allocation4], 1
    %11 = vsyncpa %s10, 0
    %12 = vsyncpa [#allocation5], 0
    %s13 = scalar_lea.sflag [#allocation5], 1
    %14 = vsyncpa %s13, 0
    loop: start=0, step=1, limit=4
    $region2: #{tpu_custom_call.1} parent=1 // loop_pre_header
      _
    $region3: #{tpu_custom_call.1} parent=1 // loop_header
      %s16 = sphi 0, %s20
      %p17 = scmp.ge.s32.totalorder %s16, 4
      %s24 = sphi 0, %s24
      %s26 = sphi 0, %s24
      %s27 = sphi 0, %s26
      %s41 = sphi 0, %s27
      %s45 = sphi 0, %s45
      %s47 = sphi 0, %s45
      %s48 = sphi 0, %s47
      %s62 = sphi 0, %s48
      %s68 = sphi 0, %s70
      %s71 = sphi 0, %s68
      %s72 = sphi 0, %s71
      %s88 = sphi 0, %s72
      %s94 = sphi 0, %s96
      %s97 = sphi 0, %s94
      %s98 = sphi 0, %s97
      %s114 = sphi 0, %s98
    $region4: #{tpu_custom_call.1} parent=1 // loop_header_branch
      %19 = sbr.rel (%p17) target = $region8
    $region5: #{tpu_custom_call.1} parent=1 // loop_body
      %s21 = ssub.s32 %s16, 1
      %s22 = ssub.s32 %s16, 2
      %s23 = sadd.s32 %s16, 1
      %s25 = sadd.s32 %s24, 1
      %p28 = scmp.eq.s32.totalorder %s16, 1
      %p29 = scmp.ne.s32.totalorder %s24, %s26
      %p30 = scmp.eq.s32.totalorder %s16, 0
      %p31 = por %p29, %p30
      %p32 = scmp.ne.s32.totalorder %s24, %s26
      %p33 = scmp.eq.s32.totalorder %s21, 1
      %p34 = por %p32, %p33
      %p35 = scmp.ne.s32.totalorder %s26, %s27
      %p36 = scmp.eq.s32.totalorder %s21, 0
      %p37 = por %p35, %p36
      %p38 = scmp.ne.s32.totalorder %s26, %s27
      %p39 = scmp.eq.s32.totalorder %s22, 1
      %p40 = por %p38, %p39
      %p42 = scmp.ne.s32.totalorder %s27, %s41
      %p43 = scmp.eq.s32.totalorder %s22, 0
      %p44 = por %p42, %p43
      %s46 = sadd.s32 %s45, 1
      %p49 = scmp.eq.s32.totalorder %s16, 1
      %p50 = scmp.ne.s32.totalorder %s45, %s47
      %p51 = scmp.eq.s32.totalorder %s16, 0
      %p52 = por %p50, %p51
      %p53 = scmp.ne.s32.totalorder %s45, %s47
      %p54 = scmp.eq.s32.totalorder %s21, 1
      %p55 = por %p53, %p54
      %p56 = scmp.ne.s32.totalorder %s47, %s48
      %p57 = scmp.eq.s32.totalorder %s21, 0
      %p58 = por %p56, %p57
      %p59 = scmp.ne.s32.totalorder %s47, %s48
      %p60 = scmp.eq.s32.totalorder %s22, 1
      %p61 = por %p59, %p60
      %p63 = scmp.ne.s32.totalorder %s48, %s62
      %p64 = scmp.eq.s32.totalorder %s22, 0
      %p65 = por %p63, %p64
      %s66 = ssub.s32 %s16, %s23
      %p67 = scmp.eq.s32.totalorder %s66, 0
      %s69 = sadd.s32 %s68, 1
      %s70 = scalar_select %p67, %s68, %s69
      %p73 = pneg %p67
      %p74 = scmp.eq.s32.totalorder %s16, 1
      %p75 = por %p73, %p74
      %p76 = scmp.ne.s32.totalorder %s68, %s71
      %p77 = scmp.eq.s32.totalorder %s16, 0
      %p78 = por %p76, %p77
      %p79 = scmp.ne.s32.totalorder %s68, %s71
      %p80 = scmp.eq.s32.totalorder %s21, 1
      %p81 = por %p79, %p80
      %p82 = scmp.ne.s32.totalorder %s71, %s72
      %p83 = scmp.eq.s32.totalorder %s21, 0
      %p84 = por %p82, %p83
      %p85 = scmp.ne.s32.totalorder %s71, %s72
      %p86 = scmp.eq.s32.totalorder %s22, 1
      %p87 = por %p85, %p86
      %p89 = scmp.ne.s32.totalorder %s72, %s88
      %p90 = scmp.eq.s32.totalorder %s22, 0
      %p91 = por %p89, %p90
      %s92 = ssub.s32 %s16, %s23
      %p93 = scmp.eq.s32.totalorder %s92, 0
      %s95 = sadd.s32 %s94, 1
      %s96 = scalar_select %p93, %s94, %s95
      %p99 = pneg %p93
      %p100 = scmp.eq.s32.totalorder %s16, 1
      %p101 = por %p99, %p100
      %p102 = scmp.ne.s32.totalorder %s94, %s97
      %p103 = scmp.eq.s32.totalorder %s16, 0
      %p104 = por %p102, %p103
      %p105 = scmp.ne.s32.totalorder %s94, %s97
      %p106 = scmp.eq.s32.totalorder %s21, 1
      %p107 = por %p105, %p106
      %p108 = scmp.ne.s32.totalorder %s97, %s98
      %p109 = scmp.eq.s32.totalorder %s21, 0
      %p110 = por %p108, %p109
      %p111 = scmp.ne.s32.totalorder %s97, %s98
      %p112 = scmp.eq.s32.totalorder %s22, 1
      %p113 = por %p111, %p112
      %p115 = scmp.ne.s32.totalorder %s98, %s114
      %p116 = scmp.eq.s32.totalorder %s22, 0
      %p117 = por %p115, %p116
      %p118 = scmp.le.s32.totalorder 1, %s16
      %p119 = scmp.lt.s32.totalorder %s16, 3
      %p120 = pnand %p118, %p119
      %p121 = pneg %p120
      // Predicated region
      $region9: #{tpu_custom_call.1} parent=5 // pred_check
        _
      $region10: #{tpu_custom_call.1} parent=5 // pred_check_branch
        %123 = sbr.rel (%p120) target = $region12
      $region11: #{tpu_custom_call.1} parent=5 // pred_region
        %s124 = ssub.s32 %s16, 1
        // Predicated region
        $region13: #{tpu_custom_call.1} parent=11 // pred_check
          %p125 = pneg %p37
        $region14: #{tpu_custom_call.1} parent=11 // pred_check_branch
          %127 = sbr.rel (%p125) target = $region16
        $region15: #{tpu_custom_call.1} parent=11 // pred_region
          _
        $region16: #{tpu_custom_call.1} parent=11 // pred_fallthru
          _
        // Predicated region
        $region17: #{tpu_custom_call.1} parent=11 // pred_check
          %p128 = pneg %p58
        $region18: #{tpu_custom_call.1} parent=11 // pred_check_branch
          %130 = sbr.rel (%p128) target = $region20
        $region19: #{tpu_custom_call.1} parent=11 // pred_region
          _
        $region20: #{tpu_custom_call.1} parent=11 // pred_fallthru
          _
      $region12: #{tpu_custom_call.1} parent=5 // pred_fallthru
        _
      %p131 = scmp.lt.s32.totalorder %s16, 2
      // Predicated region
      $region21: #{tpu_custom_call.1} parent=5 // pred_check
        %p132 = pneg %p131
      $region22: #{tpu_custom_call.1} parent=5 // pred_check_branch
        %134 = sbr.rel (%p132) target = $region24
      $region23: #{tpu_custom_call.1} parent=5 // pred_region
        // Predicated region
        $region25: #{tpu_custom_call.1} parent=23 // pred_check
          %p135 = pneg %p78
        $region26: #{tpu_custom_call.1} parent=23 // pred_check_branch
          %137 = sbr.rel (%p135) target = $region28
        $region27: #{tpu_custom_call.1} parent=23 // pred_region
          %s138 = sand.u32 %s68, 1
          %s139 = scalar_lea.sflag [#allocation4], %s138
          %s140 = sand.u32 %s68, 1
          %s141 = smul.addr %s140, 8
          %s142 = scalar_lea.vmem [#allocation3], %s141
          %s144 = ssub.s32 128, 128
          %145 = vsyncadd %s139, %s144
          %s146 = smul.addr %s16, 2
          %s147 = smul.addr %s146, 64
          %s148 = scalar_lea.hbm %s2, %s147
          %s150 = sshll.u32 %s142, 4
          %s151 = int_to_ptr.vmem [resolvable:$true] %s150
          %153 = dma.hbm_to_vmem [thread:$0]  %s148, 128, %s151, %s139
        $region28: #{tpu_custom_call.1} parent=23 // pred_fallthru
          _
      $region24: #{tpu_custom_call.1} parent=5 // pred_fallthru
        _
      %p154 = scmp.le.s32.totalorder 1, %s16
      %p155 = scmp.lt.s32.totalorder %s16, 3
      %p156 = pnand %p154, %p155
      %p157 = pneg %p156
      // Predicated region
      $region29: #{tpu_custom_call.1} parent=5 // pred_check
        _
      $region30: #{tpu_custom_call.1} parent=5 // pred_check_branch
        %159 = sbr.rel (%p156) target = $region32
      $region31: #{tpu_custom_call.1} parent=5 // pred_region
        %s160 = ssub.s32 %s16, 1
        %s161 = sand.u32 %s71, 1
        %s162 = scalar_lea.sflag [#allocation4], %s161
        %s163 = sand.u32 %s71, 1
        %s164 = smul.addr %s163, 8
        %s165 = scalar_lea.vmem [#allocation3], %s164
        // Predicated region
        $region33: #{tpu_custom_call.1} parent=31 // pred_check
          %p166 = pneg %p84
        $region34: #{tpu_custom_call.1} parent=31 // pred_check_branch
          %168 = sbr.rel (%p166) target = $region36
        $region35: #{tpu_custom_call.1} parent=31 // pred_region
          %169 = dma.done %s162, 128
        $region36: #{tpu_custom_call.1} parent=31 // pred_fallthru
          _
        %p170 = pneg %p37
        %p171 = pneg %p34
        %p172 = pneg %p58
        %p173 = pneg %p55
        %s174 = sand.u32 %s71, 1
        %s175 = scalar_lea.sflag [#allocation4], %s174
        %s176 = sand.u32 %s71, 1
        %s177 = smul.addr %s176, 8
        %s178 = scalar_lea.vmem [#allocation3], %s177
        %p179 = pneg %p84
        %p180 = pneg %p81
        %p181 = pneg %p110
        %p182 = pneg %p107
        %s183 = sand.u32 %s97, 1
        %s184 = scalar_lea.sflag [#allocation5], %s183
        %s185 = sand.u32 %s97, 1
        %s186 = smul.addr %s185, 8
        %s187 = scalar_lea.vmem [#allocation6], %s186
        %v188 = vld [vmem:[%s165] sm:$0xff]
        %v190 = vcombine.high %v188, %v188
        %vm192 = vcmask 1043456
        %v193 = vsel %vm192, %v188, 0.0
        %v194 = vsel %vm192, %v190, 0.0
        %v195 = vadd.f32 %v193, %v194
        %196 = vadd.xlane.f32.xlu0 %v195
        %v197 = vpop.xlane.xlu0 %196
        %v198 = vmul.f32 %v197, 0.00390625
        %v199 = vsel %vm192, %v198, 0.0
        %v200 = vrot.slane %v199, 4
        %v201 = vadd.f32 %v199, %v200
        %v202 = vrot.slane %v201, 2
        %v203 = vadd.f32 %v201, %v202
        %v204 = vrot.slane %v203, 1
        %v205 = vadd.f32 %v203, %v204
        %v206 = vadd.f32 %v205, 1e-06
        %v207 = vrcp.pop %v206
        %v208 = vmul.f32 %v198, %v207
        %v209 = vld [vmem:[%s0] sm:$0xf]
        %s210 = sld [smem:[#allocation2]]
        %v213 = vunpack.c.l.s4 839922192
        %v214 = vunpack.c.0.s8 %v213
        %v215 = vlaneseq
        %v216 = vshrl.u32 %v215, 7
        %v217 = vsub.s32 %v214, %v216
        %v218 = vrot.slane %v208, %v217
        %v220 = vmul.f32 %v188, %v218
        %222 = vset.pattern.permute.xlu0 0
        %223 = vperm.xlu0 %222, %v209
        %v224 = vpop.permute.xlu0 %223
        %v226 = vunpack.c.l.s4 839922192
        %v227 = vunpack.c.0.s8 %v226
        %v228 = vlaneseq
        %v229 = vshrl.u32 %v228, 7
        %v230 = vsub.s32 %v227, %v229
        %v231 = vrot.slane %v224, %v230
        %v233 = vmul.f32 %v220, %v231
        %v235 = vcombine.high %v233, %v233
        %v237 = vsel %vm192, %v233, 0.0
        %v238 = vrot.slane %v237, 4
        %v239 = vadd.f32 %v237, %v238
        %v240 = vrot.slane %v239, 2
        %v241 = vadd.f32 %v239, %v240
        %v242 = vrot.slane %v241, 1
        %v243 = vadd.f32 %v241, %v242
        %v244 = vsel %vm192, %v235, 0.0
        %v245 = vrot.slane %v244, 4
        %v246 = vadd.f32 %v244, %v245
        %v247 = vrot.slane %v246, 2
        %v248 = vadd.f32 %v246, %v247
        %v249 = vrot.slane %v248, 1
        %v250 = vadd.f32 %v248, %v249
        %v251 = vstv %s210
        %v252 = vadd.f32 %v243, %v251
        %v253 = vadd.f32 %v250, %v251
        %v254 = vxor.u32 %v252, 2147483648
        %v255 = vxor.u32 %v253, 2147483648
        %v256 = vmul.f32 %v254, 1.442695
        %v257 = vpow.pop %v256
        %v258 = vmul.f32 %v255, 1.442695
        %v259 = vpow.pop %v258
        %v260 = vadd.f32 %v257, 1.0
        %v261 = vadd.f32 %v259, 1.0
        %v262 = vrcp.pop %v260
        %v263 = vmul.f32 1.0, %v262
        %v264 = vrcp.pop %v261
        %v265 = vmul.f32 1.0, %v264
        %v268 = vcombine.low %v263, %v265
        %v270 = vmul.f32 %v220, %v268
        %271 = vst [vmem:[%s187] sm:$0xff] %v270
        %s272 = sand.u32 %s97, 1
        %s273 = scalar_lea.sflag [#allocation5], %s272
        %s274 = sand.u32 %s97, 1
        %s275 = smul.addr %s274, 8
        %s276 = scalar_lea.vmem [#allocation6], %s275
        // Predicated region
        $region37: #{tpu_custom_call.1} parent=31 // pred_check
          %p277 = pneg %p107
        $region38: #{tpu_custom_call.1} parent=31 // pred_check_branch
          %279 = sbr.rel (%p277) target = $region40
        $region39: #{tpu_custom_call.1} parent=31 // pred_region
          %s281 = ssub.s32 128, 128
          %282 = vsyncadd %s273, %s281
          %s283 = smul.addr %s21, 2
          %s284 = smul.addr %s283, 64
          %s285 = scalar_lea.hbm %s3, %s284
          %s287 = sshll.u32 %s276, 4
          %s288 = int_to_ptr.vmem [resolvable:$true] %s287
          %290 = dma.vmem_to_hbm [thread:$0]  %s288, 128, %s285, %s273
        $region40: #{tpu_custom_call.1} parent=31 // pred_fallthru
          _
      $region32: #{tpu_custom_call.1} parent=5 // pred_fallthru
        _
      %p291 = scmp.le.s32.totalorder 2, %s16
      // Predicated region
      $region41: #{tpu_custom_call.1} parent=5 // pred_check
        %p292 = pneg %p291
      $region42: #{tpu_custom_call.1} parent=5 // pred_check_branch
        %294 = sbr.rel (%p292) target = $region44
      $region43: #{tpu_custom_call.1} parent=5 // pred_region
        %s295 = ssub.s32 %s16, 2
        // Predicated region
        $region45: #{tpu_custom_call.1} parent=43 // pred_check
          %p296 = pneg %p113
        $region46: #{tpu_custom_call.1} parent=43 // pred_check_branch
          %298 = sbr.rel (%p296) target = $region48
        $region47: #{tpu_custom_call.1} parent=43 // pred_region
          %s299 = sand.u32 %s98, 1
          %s300 = scalar_lea.sflag [#allocation5], %s299
          %s301 = sand.u32 %s98, 1
          %s302 = smul.addr %s301, 8
          %s303 = scalar_lea.vmem [#allocation6], %s302
          %304 = dma.done %s300, 128
        $region48: #{tpu_custom_call.1} parent=43 // pred_fallthru
          _
      $region44: #{tpu_custom_call.1} parent=5 // pred_fallthru
        _
    $region6: #{tpu_custom_call.1} parent=1 // loop_footer
      %s20 = sadd.s32 1, %s16
    $region7: #{tpu_custom_call.1} parent=1 // loop_footer_branch
      %15 = sbr.rel target = $region3
    $region8: #{tpu_custom_call.1} parent=1 // loop_exit
      _
    %305 = vsyncpa [#allocation4], 1
    %s306 = scalar_lea.sflag [#allocation4], 1
    %307 = vsyncpa %s306, 1
    %308 = vsyncpa [#allocation5], 1
    %s309 = scalar_lea.sflag [#allocation5], 1
    %310 = vsyncpa %s309, 1

</llo_original>
